<compile_context>
chip_gen: v7x
topology: tpu7x:2x2x1
jax: 0.10.0
libtpu: 0.0.40
codegen_flags: <defaults>
</compile_context>

<pallas_src>
import math

import jax
import jax.numpy as jnp
from jax.experimental import pallas as pl
from jax.experimental.pallas import tpu as pltpu

# ---- config (mirrors the PyTorch Config dataclass) ----
N_EMBD = 64            # config.n_embd
HIDDEN = 4 * N_EMBD    # c_fc output width


def _mlp_kernel(x_ref, w_fc_t_ref, w_proj_t_ref, o_ref):
    # x_ref:        (TM, C)    tile of flattened (B*T, C) rows
    # w_fc_t_ref:   (C, 4C)    transposed c_fc weight (resident)
    # w_proj_t_ref: (4C, C)    transposed c_proj weight (resident)
    # o_ref:        (TM, C)
    x = x_ref[...]

    # c_fc: h = x @ W_fc^T   (PyTorch Linear semantics, bias=False)
    h = jnp.dot(x, w_fc_t_ref[...], preferred_element_type=jnp.float32)   # (TM, 4C)

    # GELU, tanh approximation (matches nn.GELU(approximate='tanh')).
    # tanh lowers to the EUP slot -> overlaps with surrounding VPU/MXU work.
    k = jnp.float32(math.sqrt(2.0 / math.pi))
    g = 0.5 * h * (1.0 + jnp.tanh(k * (h + 0.044715 * (h * h * h))))

    # c_proj: out = g @ W_proj^T
    out = jnp.dot(g, w_proj_t_ref[...], preferred_element_type=jnp.float32)  # (TM, C)
    o_ref[...] = out.astype(o_ref.dtype)


def mlp_forward(x, w_fc, w_proj, *, max_rows_per_step=512):
    """x: (B, T, C) f32; w_fc: (4C, C); w_proj: (C, 4C)  (PyTorch weight layout)."""
    B, T, C = x.shape
    H = w_fc.shape[0]
    assert w_fc.shape == (H, C) and w_proj.shape == (C, H)

    R = B * T
    x2 = x.reshape(R, C)          # fold (B, T) -> rows: one dense matmul per projection
    w_fc_t = w_fc.T               # (C, 4C)  -- glue transpose stays in plain JAX
    w_proj_t = w_proj.T           # (4C, C)

    # One grid step for small problems; tile rows only when needed.
    tm = R if R <= max_rows_per_step else max_rows_per_step
    pad = (-R) % tm
    if pad:
        x2 = jnp.pad(x2, ((0, pad), (0, 0)))
    Rp = R + pad

    out2 = pl.pallas_call(
        _mlp_kernel,
        out_shape=jax.ShapeDtypeStruct((Rp, C), x.dtype),
        grid_spec=pltpu.PrefetchScalarGridSpec(
            num_scalar_prefetch=0,
            grid=(Rp // tm,),
            in_specs=[
                pl.BlockSpec((tm, C), lambda i: (i, 0)),   # row tile of activations
                pl.BlockSpec((C, H), lambda i: (0, 0)),    # resident c_fc^T
                pl.BlockSpec((H, C), lambda i: (0, 0)),    # resident c_proj^T
            ],
            out_specs=pl.BlockSpec((tm, C), lambda i: (i, 0)),
        ),
        compiler_params=pltpu.CompilerParams(
            dimension_semantics=("parallel",)),
    )(x2, w_fc_t, w_proj_t)

    return out2[:R].reshape(B, T, C)


def _reference(x, w_fc, w_proj):
    """Pure-JAX reference matching the PyTorch MLP forward (tanh-approx GELU)."""
    h = x @ w_fc.T
    g = jax.nn.gelu(h, approximate=True)
    return g @ w_proj.T


if __name__ == "__main__":
    B, T, C = 2, 16, N_EMBD

    key = jax.random.PRNGKey(0)
    kx, kf, kp = jax.random.split(key, 3)

    # PyTorch Linear default init: U(-1/sqrt(fan_in), +1/sqrt(fan_in))
    b_fc = 1.0 / math.sqrt(C)
    b_proj = 1.0 / math.sqrt(HIDDEN)
    w_fc = jax.random.uniform(kf, (HIDDEN, C), jnp.float32, -b_fc, b_fc)
    w_proj = jax.random.uniform(kp, (C, HIDDEN), jnp.float32, -b_proj, b_proj)
    x = jax.random.normal(kx, (B, T, C), jnp.float32)

    out = mlp_forward(x, w_fc, w_proj)
    out = jax.block_until_ready(out)

    ref = _reference(x, w_fc, w_proj)
    assert out.shape == (B, T, C)
    assert jnp.allclose(out, ref, atol=1e-4, rtol=1e-4), "mismatch vs JAX reference"

    print("KERNEL_OK")
</pallas_src>

<mosaic_0001>
module attributes {stable_mosaic.version = 11 : i64} {
  func.func @_mlp_kernel(%arg0: i32, %arg1: memref<32x64xf32, #tpu.memory_space<vmem>>, %arg2: memref<64x256xf32, #tpu.memory_space<vmem>>, %arg3: memref<256x64xf32, #tpu.memory_space<vmem>>, %arg4: memref<32x64xf32, #tpu.memory_space<vmem>>) attributes {dimension_semantics = [#tpu.dimension_semantics<parallel>], iteration_bounds = array<i64: 1>, scalar_prefetch = 0 : i64, scratch_operands = 0 : i64, tpu.core_type = #tpu.core_type<tc>, window_params = [{transform_indices = @transform_0, window_bounds = array<i64: 32, 64>}, {pipeline_mode = #tpu.pipeline_mode<synchronous>, transform_indices = @transform_1, window_bounds = array<i64: 64, 256>}, {pipeline_mode = #tpu.pipeline_mode<synchronous>, transform_indices = @transform_2, window_bounds = array<i64: 256, 64>}, {transform_indices = @transform_3, window_bounds = array<i64: 32, 64>}]} {
    %c0 = arith.constant 0 : index
    %c0_0 = arith.constant 0 : index
    %0 = vector.load %arg1[%c0, %c0_0] : memref<32x64xf32, #tpu.memory_space<vmem>>, vector<32x64xf32>
    %c0_1 = arith.constant 0 : index
    %c0_2 = arith.constant 0 : index
    %1 = vector.load %arg2[%c0_1, %c0_2] : memref<64x256xf32, #tpu.memory_space<vmem>>, vector<64x256xf32>
    %cst = arith.constant dense<0.000000e+00> : vector<32x256xf32>
    %2 = tpu.matmul %0, %1, %cst {dimension_numbers = #tpu.dot_dimension_numbers<[1], [0], [0], [1], [0, 0, 1, 1], [], []>} : vector<32x64xf32>, vector<64x256xf32>, vector<32x256xf32> -> vector<32x256xf32>
    %cst_3 = arith.constant 5.000000e-01 : f32
    %3 = vector.broadcast %cst_3 : f32 to vector<32x256xf32>
    %4 = arith.mulf %3, %2 : vector<32x256xf32>
    %5 = arith.mulf %2, %2 : vector<32x256xf32>
    %6 = arith.mulf %5, %2 : vector<32x256xf32>
    %cst_4 = arith.constant 4.471500e-02 : f32
    %7 = vector.broadcast %cst_4 : f32 to vector<32x256xf32>
    %8 = arith.mulf %7, %6 : vector<32x256xf32>
    %9 = arith.addf %2, %8 : vector<32x256xf32>
    %cst_5 = arith.constant 0.797884583 : f32
    %10 = vector.broadcast %cst_5 : f32 to vector<32x256xf32>
    %11 = arith.mulf %10, %9 : vector<32x256xf32>
    %12 = math.tanh %11 : vector<32x256xf32>
    %cst_6 = arith.constant 1.000000e+00 : f32
    %13 = vector.broadcast %cst_6 : f32 to vector<32x256xf32>
    %14 = arith.addf %13, %12 : vector<32x256xf32>
    %15 = arith.mulf %4, %14 : vector<32x256xf32>
    %c0_7 = arith.constant 0 : index
    %c0_8 = arith.constant 0 : index
    %16 = vector.load %arg3[%c0_7, %c0_8] : memref<256x64xf32, #tpu.memory_space<vmem>>, vector<256x64xf32>
    %cst_9 = arith.constant dense<0.000000e+00> : vector<32x64xf32>
    %17 = tpu.matmul %15, %16, %cst_9 {dimension_numbers = #tpu.dot_dimension_numbers<[1], [0], [0], [1], [0, 0, 1, 1], [], []>} : vector<32x256xf32>, vector<256x64xf32>, vector<32x64xf32> -> vector<32x64xf32>
    %c0_10 = arith.constant 0 : index
    %c0_11 = arith.constant 0 : index
    %18 = vector.load %arg4[%c0_10, %c0_11] : memref<32x64xf32, #tpu.memory_space<vmem>>, vector<32x64xf32>
    tpu.vector_store %arg4[%c0_10, %c0_11], %17 {strides = array<i32>} : memref<32x64xf32, #tpu.memory_space<vmem>>, vector<32x64xf32>,
    return
  }
  func.func @transform_0(%arg0: i32) -> (i32, i32) {
    %c0_i32 = arith.constant 0 : i32
    %c0_i32_0 = arith.constant 0 : i32
    return %arg0, %c0_i32 : i32, i32
  }
  func.func @transform_1(%arg0: i32) -> (i32, i32) {
    %c0_i32 = arith.constant 0 : i32
    %c0_i32_0 = arith.constant 0 : i32
    %c0_i32_1 = arith.constant 0 : i32
    return %c0_i32, %c0_i32_0 : i32, i32
  }
  func.func @transform_2(%arg0: i32) -> (i32, i32) {
    %c0_i32 = arith.constant 0 : i32
    %c0_i32_0 = arith.constant 0 : i32
    %c0_i32_1 = arith.constant 0 : i32
    return %c0_i32, %c0_i32_0 : i32, i32
  }
  func.func @transform_3(%arg0: i32) -> (i32, i32) {
    %c0_i32 = arith.constant 0 : i32
    %c0_i32_0 = arith.constant 0 : i32
    return %arg0, %c0_i32 : i32, i32
  }
}

</mosaic_0001>

<llo_original>
// kernel: tpu_custom_call.1
$region0: #{tpu_custom_call.1}
  #allocation0 [shape = 'u32[]', space=smem, size = 0x4, offset = 0x4, fixed_abs, tag = 'smem constant byte address 0x4 - core index']
  #allocation1 [shape = 'u32[144,128]{1,0:T(1,128)}', space=vmem, size = 0x12000, scoped, tag = 'internal scratch']
  %s0 = inlined_call_operand.vmem [shape: f32[32,64], index: 0, kind: input, shape index: {}]
  %s1 = inlined_call_operand.vmem [shape: f32[64,256], index: 1, kind: input, shape index: {}]
  %s2 = inlined_call_operand.vmem [shape: f32[256,64], index: 2, kind: input, shape index: {}]
  %s3 = inlined_call_operand.hbm [shape: f32[32,64], index: 3, kind: output, shape index: {}]
  %s4 = sld [smem:[#allocation0]]
  $region22: #{tpu_custom_call.1} parent=0
    _
  %s6 = ssub.s32 1, %s4
  %s7 = scalar_select 0, %s6, %s4
  $region1: #{tpu_custom_call.1} parent=0
    #allocation2 [shape = 'u8[16384]{0}', space=vmem, size = 0x4000, scoped, tag = 'output window, operand 0, single buffered']
    #allocation3 [shape = 's32[1]{0}', space=sflag, size = 0x4, scoped, tag = 'scoped memory for tpu_custom_call.1']
    %8 = vsyncpa [#allocation3], 0
    // Predicated region
    $region2: #{tpu_custom_call.1} parent=1 // pred_check
      _
    $region3: #{tpu_custom_call.1} parent=1 // pred_check_branch
      %10 = sbr.rel (0) target = $region5
    $region4: #{tpu_custom_call.1} parent=1 // pred_region
      _
    $region5: #{tpu_custom_call.1} parent=1 // pred_fallthru
      _
    // Predicated region
    $region6: #{tpu_custom_call.1} parent=1 // pred_check
      _
    $region7: #{tpu_custom_call.1} parent=1 // pred_check_branch
      %12 = sbr.rel (0) target = $region9
    $region8: #{tpu_custom_call.1} parent=1 // pred_region
      _
    $region9: #{tpu_custom_call.1} parent=1 // pred_fallthru
      _
    // Predicated region
    $region10: #{tpu_custom_call.1} parent=1 // pred_check
      _
    $region11: #{tpu_custom_call.1} parent=1 // pred_check_branch
      %14 = sbr.rel (0) target = $region13
    $region12: #{tpu_custom_call.1} parent=1 // pred_region
      _
    $region13: #{tpu_custom_call.1} parent=1 // pred_fallthru
      _
    %v15 = vld [vmem:[%s0] sm:$0xff]
    %v16 = vld [vmem:[%s0 + $0x8] sm:$0xff]
    %v17 = vld [vmem:[%s0 + $0x10] sm:$0xff]
    %v18 = vld [vmem:[%s0 + $0x18] sm:$0xff]
    %v19 = vld [vmem:[%s1] sm:$0xff]
    %v20 = vld [vmem:[%s1 + $0x8] sm:$0xff]
    %v21 = vld [vmem:[%s1 + $0x10] sm:$0xff]
    %v22 = vld [vmem:[%s1 + $0x18] sm:$0xff]
    %v23 = vld [vmem:[%s1 + $0x20] sm:$0xff]
    %v24 = vld [vmem:[%s1 + $0x28] sm:$0xff]
    %v25 = vld [vmem:[%s1 + $0x30] sm:$0xff]
    %v26 = vld [vmem:[%s1 + $0x38] sm:$0xff]
    %v27 = vld [vmem:[%s1 + $0x40] sm:$0xff]
    %v28 = vld [vmem:[%s1 + $0x48] sm:$0xff]
    %v29 = vld [vmem:[%s1 + $0x50] sm:$0xff]
    %v30 = vld [vmem:[%s1 + $0x58] sm:$0xff]
    %v31 = vld [vmem:[%s1 + $0x60] sm:$0xff]
    %v32 = vld [vmem:[%s1 + $0x68] sm:$0xff]
    %v33 = vld [vmem:[%s1 + $0x70] sm:$0xff]
    %v34 = vld [vmem:[%s1 + $0x78] sm:$0xff]
    %vm35 = vcmask 523264
    %v37 = vsel %vm35, %v15, 0
    %v40 = vsel %vm35, %v16, 0
    %v43 = vsel %vm35, %v17, 0
    %v46 = vsel %vm35, %v18, 0
    %48 = vmatprep.subr.mxu0 %v20
    %49 = vmatpush1.msra.mxu0 %v19
    %50 = vmatprep.subr.mxu0 %v22
    %51 = vmatpush1.msra.mxu0 %v21
    %52 = vmatprep.subr.mxu0 %v24
    %53 = vmatpush1.msra.mxu0 %v23
    %54 = vmatprep.subr.mxu0 %v26
    %55 = vmatpush1.msra.mxu0 %v25
    %56 = vmatprep.subr.mxu0 %v28
    %57 = vmatpush1.msra.mxu0 %v27
    %58 = vmatprep.subr.mxu0 %v30
    %59 = vmatpush1.msra.mxu0 %v29
    %60 = vmatprep.subr.mxu0 %v32
    %61 = vmatpush1.msra.mxu0 %v31
    %62 = vmatprep.subr.mxu0 %v34
    %63 = vmatpush1.msra.mxu0 %v33
    %64 = vmatprep.subr.mxu0 0.0
    %65 = vmatpush1.msra.mxu0 0.0
    %66 = vmatprep.subr.mxu0 0.0
    %67 = vmatpush1.msra.mxu0 0.0
    %68 = vmatprep.subr.mxu0 0.0
    %69 = vmatpush1.msra.mxu0 0.0
    %70 = vmatprep.subr.mxu0 0.0
    %71 = vmatpush1.msra.mxu0 0.0
    %72 = vmatprep.subr.mxu0 0.0
    %73 = vmatpush1.msra.mxu0 0.0
    %74 = vmatprep.subr.mxu0 0.0
    %75 = vmatpush1.msra.mxu0 0.0
    %76 = vmatprep.subr.mxu0 0.0
    %77 = vmatpush1.msra.mxu0 0.0
    %78 = vmatprep.subr.mxu0 0.0
    %79 = vmatpush1.msra.mxu0 0.0
    %80 = vmatprep.subr.mxu0 0.0
    %81 = vmatpush1.msra.mxu0 0.0
    %82 = vmatprep.subr.mxu0 0.0
    %83 = vmatpush1.msra.mxu0 0.0
    %84 = vmatprep.subr.mxu0 0.0
    %85 = vmatpush1.msra.mxu0 0.0
    %86 = vmatprep.subr.mxu0 0.0
    %87 = vmatpush1.msra.mxu0 0.0
    %88 = vmatprep.subr.mxu0 0.0
    %89 = vmatpush1.msra.mxu0 0.0
    %90 = vmatprep.subr.mxu0 0.0
    %91 = vmatpush1.msra.mxu0 0.0
    %92 = vmatprep.subr.mxu0 0.0
    %93 = vmatpush1.msra.mxu0 0.0
    %94 = vmatprep.subr.mxu0 0.0
    %95 = vmatpush1.msra.mxu0 0.0
    %96 = vmatprep.subr.mxu0 0.0
    %97 = vmatpush1.msra.mxu0 0.0
    %98 = vmatprep.subr.mxu0 0.0
    %99 = vmatpush1.msra.mxu0 0.0
    %100 = vmatprep.subr.mxu0 0.0
    %101 = vmatpush1.msra.mxu0 0.0
    %102 = vmatprep.subr.mxu0 0.0
    %103 = vmatpush1.msra.mxu0 0.0
    %104 = vmatprep.subr.mxu0 0.0
    %105 = vmatpush1.msra.mxu0 0.0
    %106 = vmatprep.subr.mxu0 0.0
    %107 = vmatpush1.msra.mxu0 0.0
    %108 = vmatprep.subr.mxu0 0.0
    %109 = vmatpush1.msra.mxu0 0.0
    %110 = vmatprep.subr.mxu0 0.0
    %111 = vmatpush1.msra.mxu0 0.0
    %112 = vmatprep.mubr.f32.mxu0 0.0
    %113 = vmatmul.mubr.f32.gmra.mrb[0].mxu0 %v37
    %v114 = vpop.f32.mrb[0].mxu0
    %v115 = vadd.f32 0.0, %v114
    %v116 = vpop.f32.mrb[0].mxu0
    %v117 = vadd.f32 0.0, %v116
    %118 = vmatprep.mubr.f32.mxu0 0.0
    %119 = vmatmul.mubr.f32.gmra.mrb[0].mxu0 %v40
    %v120 = vpop.f32.mrb[0].mxu0
    %v121 = vadd.f32 0.0, %v120
    %v122 = vpop.f32.mrb[0].mxu0
    %v123 = vadd.f32 0.0, %v122
    %124 = vmatprep.mubr.f32.mxu0 0.0
    %125 = vmatmul.mubr.f32.gmra.mrb[0].mxu0 %v43
    %v126 = vpop.f32.mrb[0].mxu0
    %v127 = vadd.f32 0.0, %v126
    %v128 = vpop.f32.mrb[0].mxu0
    %v129 = vadd.f32 0.0, %v128
    %130 = vmatprep.mubr.f32.mxu0 0.0
    %131 = vmatmul.mubr.f32.gmra.mrb[0].mxu0 %v46
    %v132 = vpop.f32.mrb[0].mxu0
    %v133 = vadd.f32 0.0, %v132
    %v134 = vpop.f32.mrb[0].mxu0
    %v135 = vadd.f32 0.0, %v134
    %136 = vdwg.mxu0
    %v137 = vmul.f32 %v115, 0.5
    %v138 = vmul.f32 %v117, 0.5
    %v139 = vmul.f32 %v121, 0.5
    %v140 = vmul.f32 %v123, 0.5
    %v141 = vmul.f32 %v127, 0.5
    %v142 = vmul.f32 %v129, 0.5
    %v143 = vmul.f32 %v133, 0.5
    %v144 = vmul.f32 %v135, 0.5
    %v145 = vmul.f32 %v115, %v115
    %v146 = vmul.f32 %v117, %v117
    %v147 = vmul.f32 %v121, %v121
    %v148 = vmul.f32 %v123, %v123
    %v149 = vmul.f32 %v127, %v127
    %v150 = vmul.f32 %v129, %v129
    %v151 = vmul.f32 %v133, %v133
    %v152 = vmul.f32 %v135, %v135
    %v153 = vmul.f32 %v145, %v115
    %v154 = vmul.f32 %v146, %v117
    %v155 = vmul.f32 %v147, %v121
    %v156 = vmul.f32 %v148, %v123
    %v157 = vmul.f32 %v149, %v127
    %v158 = vmul.f32 %v150, %v129
    %v159 = vmul.f32 %v151, %v133
    %v160 = vmul.f32 %v152, %v135
    %v161 = vmul.f32 %v153, 0.044715
    %v162 = vmul.f32 %v154, 0.044715
    %v163 = vmul.f32 %v155, 0.044715
    %v164 = vmul.f32 %v156, 0.044715
    %v165 = vmul.f32 %v157, 0.044715
    %v166 = vmul.f32 %v158, 0.044715
    %v167 = vmul.f32 %v159, 0.044715
    %v168 = vmul.f32 %v160, 0.044715
    %v169 = vadd.f32 %v115, %v161
    %v170 = vadd.f32 %v117, %v162
    %v171 = vadd.f32 %v121, %v163
    %v172 = vadd.f32 %v123, %v164
    %v173 = vadd.f32 %v127, %v165
    %v174 = vadd.f32 %v129, %v166
    %v175 = vadd.f32 %v133, %v167
    %v176 = vadd.f32 %v135, %v168
    %v177 = vmul.f32 %v169, 0.7978846
    %v178 = vmul.f32 %v170, 0.7978846
    %v179 = vmul.f32 %v171, 0.7978846
    %v180 = vmul.f32 %v172, 0.7978846
    %v181 = vmul.f32 %v173, 0.7978846
    %v182 = vmul.f32 %v174, 0.7978846
    %v183 = vmul.f32 %v175, 0.7978846
    %v184 = vmul.f32 %v176, 0.7978846
    %v185 = vtanh.pop %v177
    %v186 = vtanh.pop %v178
    %v187 = vtanh.pop %v179
    %v188 = vtanh.pop %v180
    %v189 = vtanh.pop %v181
    %v190 = vtanh.pop %v182
    %v191 = vtanh.pop %v183
    %v192 = vtanh.pop %v184
    %v193 = vadd.f32 %v185, 1.0
    %v194 = vadd.f32 %v186, 1.0
    %v195 = vadd.f32 %v187, 1.0
    %v196 = vadd.f32 %v188, 1.0
    %v197 = vadd.f32 %v189, 1.0
    %v198 = vadd.f32 %v190, 1.0
    %v199 = vadd.f32 %v191, 1.0
    %v200 = vadd.f32 %v192, 1.0
    %v201 = vmul.f32 %v137, %v193
    %v202 = vmul.f32 %v138, %v194
    %v203 = vmul.f32 %v139, %v195
    %v204 = vmul.f32 %v140, %v196
    %v205 = vmul.f32 %v141, %v197
    %v206 = vmul.f32 %v142, %v198
    %v207 = vmul.f32 %v143, %v199
    %v208 = vmul.f32 %v144, %v200
    %v209 = vld [vmem:[%s2] sm:$0xff]
    %v210 = vld [vmem:[%s2 + $0x8] sm:$0xff]
    %v211 = vld [vmem:[%s2 + $0x10] sm:$0xff]
    %v212 = vld [vmem:[%s2 + $0x18] sm:$0xff]
    %v213 = vld [vmem:[%s2 + $0x20] sm:$0xff]
    %v214 = vld [vmem:[%s2 + $0x28] sm:$0xff]
    %v215 = vld [vmem:[%s2 + $0x30] sm:$0xff]
    %v216 = vld [vmem:[%s2 + $0x38] sm:$0xff]
    %v217 = vld [vmem:[%s2 + $0x40] sm:$0xff]
    %v218 = vld [vmem:[%s2 + $0x48] sm:$0xff]
    %v219 = vld [vmem:[%s2 + $0x50] sm:$0xff]
    %v220 = vld [vmem:[%s2 + $0x58] sm:$0xff]
    %v221 = vld [vmem:[%s2 + $0x60] sm:$0xff]
    %v222 = vld [vmem:[%s2 + $0x68] sm:$0xff]
    %v223 = vld [vmem:[%s2 + $0x70] sm:$0xff]
    %v224 = vld [vmem:[%s2 + $0x78] sm:$0xff]
    %v225 = vld [vmem:[%s2 + $0x80] sm:$0xff]
    %v226 = vld [vmem:[%s2 + $0x88] sm:$0xff]
    %v227 = vld [vmem:[%s2 + $0x90] sm:$0xff]
    %v228 = vld [vmem:[%s2 + $0x98] sm:$0xff]
    %v229 = vld [vmem:[%s2 + $0xa0] sm:$0xff]
    %v230 = vld [vmem:[%s2 + $0xa8] sm:$0xff]
    %v231 = vld [vmem:[%s2 + $0xb0] sm:$0xff]
    %v232 = vld [vmem:[%s2 + $0xb8] sm:$0xff]
    %v233 = vld [vmem:[%s2 + $0xc0] sm:$0xff]
    %v234 = vld [vmem:[%s2 + $0xc8] sm:$0xff]
    %v235 = vld [vmem:[%s2 + $0xd0] sm:$0xff]
    %v236 = vld [vmem:[%s2 + $0xd8] sm:$0xff]
    %v237 = vld [vmem:[%s2 + $0xe0] sm:$0xff]
    %v238 = vld [vmem:[%s2 + $0xe8] sm:$0xff]
    %v239 = vld [vmem:[%s2 + $0xf0] sm:$0xff]
    %v240 = vld [vmem:[%s2 + $0xf8] sm:$0xff]
    %241 = vmatprep.subr.mxu0 0.0
    %242 = vmatpush1.msra.mxu0 %v209
    %243 = vmatprep.subr.mxu0 0.0
    %244 = vmatpush1.msra.mxu0 %v210
    %245 = vmatprep.subr.mxu0 0.0
    %246 = vmatpush1.msra.mxu0 %v211
    %247 = vmatprep.subr.mxu0 0.0
    %248 = vmatpush1.msra.mxu0 %v212
    %249 = vmatprep.subr.mxu0 0.0
    %250 = vmatpush1.msra.mxu0 %v213
    %251 = vmatprep.subr.mxu0 0.0
    %252 = vmatpush1.msra.mxu0 %v214
    %253 = vmatprep.subr.mxu0 0.0
    %254 = vmatpush1.msra.mxu0 %v215
    %255 = vmatprep.subr.mxu0 0.0
    %256 = vmatpush1.msra.mxu0 %v216
    %257 = vmatprep.subr.mxu0 0.0
    %258 = vmatpush1.msra.mxu0 %v217
    %259 = vmatprep.subr.mxu0 0.0
    %260 = vmatpush1.msra.mxu0 %v218
    %261 = vmatprep.subr.mxu0 0.0
    %262 = vmatpush1.msra.mxu0 %v219
    %263 = vmatprep.subr.mxu0 0.0
    %264 = vmatpush1.msra.mxu0 %v220
    %265 = vmatprep.subr.mxu0 0.0
    %266 = vmatpush1.msra.mxu0 %v221
    %267 = vmatprep.subr.mxu0 0.0
    %268 = vmatpush1.msra.mxu0 %v222
    %269 = vmatprep.subr.mxu0 0.0
    %270 = vmatpush1.msra.mxu0 %v223
    %271 = vmatprep.subr.mxu0 0.0
    %272 = vmatpush1.msra.mxu0 %v224
    %273 = vmatprep.subr.mxu0 0.0
    %274 = vmatpush1.msra.mxu0 %v225
    %275 = vmatprep.subr.mxu0 0.0
    %276 = vmatpush1.msra.mxu0 %v226
    %277 = vmatprep.subr.mxu0 0.0
    %278 = vmatpush1.msra.mxu0 %v227
    %279 = vmatprep.subr.mxu0 0.0
    %280 = vmatpush1.msra.mxu0 %v228
    %281 = vmatprep.subr.mxu0 0.0
    %282 = vmatpush1.msra.mxu0 %v229
    %283 = vmatprep.subr.mxu0 0.0
    %284 = vmatpush1.msra.mxu0 %v230
    %285 = vmatprep.subr.mxu0 0.0
    %286 = vmatpush1.msra.mxu0 %v231
    %287 = vmatprep.subr.mxu0 0.0
    %288 = vmatpush1.msra.mxu0 %v232
    %289 = vmatprep.subr.mxu0 0.0
    %290 = vmatpush1.msra.mxu0 %v233
    %291 = vmatprep.subr.mxu0 0.0
    %292 = vmatpush1.msra.mxu0 %v234
    %293 = vmatprep.subr.mxu0 0.0
    %294 = vmatpush1.msra.mxu0 %v235
    %295 = vmatprep.subr.mxu0 0.0
    %296 = vmatpush1.msra.mxu0 %v236
    %297 = vmatprep.subr.mxu0 0.0
    %298 = vmatpush1.msra.mxu0 %v237
    %299 = vmatprep.subr.mxu0 0.0
    %300 = vmatpush1.msra.mxu0 %v238
    %301 = vmatprep.subr.mxu0 0.0
    %302 = vmatpush1.msra.mxu0 %v239
    %303 = vmatprep.subr.mxu0 0.0
    %304 = vmatpush1.msra.mxu0 %v240
    %305 = vmatprep.mubr.f32.mxu0 %v202
    %306 = vmatmul.mubr.f32.gmra.mrb[0].mxu0 %v201
    %v307 = vpop.f32.mrb[0].mxu0
    %v308 = vadd.f32 0.0, %v307
    %v309 = vpop.f32.mrb[0].mxu0
    %310 = vmatprep.mubr.f32.mxu0 %v204
    %311 = vmatmul.mubr.f32.gmra.mrb[0].mxu0 %v203
    %v312 = vpop.f32.mrb[0].mxu0
    %v313 = vadd.f32 0.0, %v312
    %v314 = vpop.f32.mrb[0].mxu0
    %315 = vmatprep.mubr.f32.mxu0 %v206
    %316 = vmatmul.mubr.f32.gmra.mrb[0].mxu0 %v205
    %v317 = vpop.f32.mrb[0].mxu0
    %v318 = vadd.f32 0.0, %v317
    %v319 = vpop.f32.mrb[0].mxu0
    %320 = vmatprep.mubr.f32.mxu0 %v208
    %321 = vmatmul.mubr.f32.gmra.mrb[0].mxu0 %v207
    %v322 = vpop.f32.mrb[0].mxu0
    %v323 = vadd.f32 0.0, %v322
    %v324 = vpop.f32.mrb[0].mxu0
    %325 = vdwg.mxu0
    %326 = vst.msk [vmem:[#allocation2] sm:$0xff] %vm35, %v308
    %327 = vst.msk [vmem:[#allocation2 + $0x8] sm:$0xff] %vm35, %v313
    %328 = vst.msk [vmem:[#allocation2 + $0x10] sm:$0xff] %vm35, %v318
    %329 = vst.msk [vmem:[#allocation2 + $0x18] sm:$0xff] %vm35, %v323
    // Predicated region
    $region14: #{tpu_custom_call.1} parent=1 // pred_check
      _
    $region15: #{tpu_custom_call.1} parent=1 // pred_check_branch
      %331 = sbr.rel (0) target = $region17
    $region16: #{tpu_custom_call.1} parent=1 // pred_region
      %s333 = ssub.s32 512, 512
      %334 = vsyncadd [#allocation3], %s333
      %s335 = sshll.u32 [#allocation2], 4
      %s336 = int_to_ptr.vmem [resolvable:$true] %s335
      %341 = dma.vmem_to_hbm [thread:$0]  %s336, 512, %s3, [#allocation3], 128, 128, 8
    $region17: #{tpu_custom_call.1} parent=1 // pred_fallthru
      _
    // Predicated region
    $region18: #{tpu_custom_call.1} parent=1 // pred_check
      _
    $region19: #{tpu_custom_call.1} parent=1 // pred_check_branch
      %343 = sbr.rel (0) target = $region21
    $region20: #{tpu_custom_call.1} parent=1 // pred_region
      %344 = dma.done [#allocation3], 512
    $region21: #{tpu_custom_call.1} parent=1 // pred_fallthru
      _
    %345 = vsyncpa [#allocation3], 1

</llo_original>
